<compile_context>
chip_gen: v6e
topology: v6e:2x2x1
jax: 0.10.0
libtpu: 0.0.40
codegen_flags: <defaults>
</compile_context>

<pallas_src>
import functools

import jax
import jax.numpy as jnp
from jax.experimental import pallas as pl
from jax.experimental.pallas import tpu as pltpu

STATE_DIM = 4        # CartPole-v1 observation_space.shape[0]
ACTION_DIM = 2       # CartPole-v1 action_space.n
HIDDEN_DIM = 128
MAX_BLOCK_ROWS = 1024  # per-block batch rows for large batches (VMEM-safe on v7x)


def qnet_kernel(x_ref, w1_ref, b1_ref, w2_ref, b2_ref, w3_ref, b3_ref, out_ref):
    tb = x_ref.shape[0]
    x = x_ref[...]                               # (TB, 4)  float32
    w1 = w1_ref[...]                             # (4, H)   float32

    # fc1 + ReLU on the VPU: contraction depth K=4 is too shallow for the MXU,
    # so do 4 broadcast FMAs (static lane slices, unrolled at trace time).
    h1 = jnp.broadcast_to(b1_ref[...], (tb, HIDDEN_DIM))
    for k in range(STATE_DIM):
        h1 = h1 + x[:, k:k + 1] * w1[k:k + 1, :]
    h1 = jnp.maximum(h1, 0.0)

    # fc2 + ReLU: MXU matmul, f32 accumulation.
    h2 = jnp.dot(h1, w2_ref[...], preferred_element_type=jnp.float32)
    h2 = jnp.maximum(h2 + b2_ref[...], 0.0)

    # fc3 (no activation): narrow (H, ACTION_DIM) weights; the store writes only
    # the ACTION_DIM real Q-value lanes (8 B/row), nothing padded.
    out = jnp.dot(h2, w3_ref[...], preferred_element_type=jnp.float32)
    out_ref[...] = out + b3_ref[...]


def _round_up(n, m):
    return ((n + m - 1) // m) * m


@functools.partial(jax.jit, static_argnames=("block_rows",))
def qnet_forward(x, params, block_rows=MAX_BLOCK_ROWS):
    """Fused QNet forward: returns (B, ACTION_DIM) f32 Q-values."""
    w1, b1, w2, b2, w3, b3 = params
    B = x.shape[0]

    # Single block for small batches (one grid step = no per-step overhead);
    # large batches stream in block_rows-sized blocks (parallel across cores).
    tb = min(_round_up(B, 8), block_rows)
    n_blocks = pl.cdiv(B, tb)
    Bp = n_blocks * tb
    if Bp != B:
        x = jnp.pad(x, ((0, Bp - B), (0, 0)))

    out = pl.pallas_call(
        qnet_kernel,
        out_shape=jax.ShapeDtypeStruct((Bp, ACTION_DIM), jnp.float32),
        grid=(n_blocks,),
        in_specs=[
            # Activations stream block-by-block along the batch axis.
            pl.BlockSpec((tb, STATE_DIM), lambda i: (i, 0)),
            # Weights / biases: same block every step -> loaded once, resident.
            pl.BlockSpec((STATE_DIM, HIDDEN_DIM), lambda i: (0, 0)),
            pl.BlockSpec((1, HIDDEN_DIM), lambda i: (0, 0)),
            pl.BlockSpec((HIDDEN_DIM, HIDDEN_DIM), lambda i: (0, 0)),
            pl.BlockSpec((1, HIDDEN_DIM), lambda i: (0, 0)),
            pl.BlockSpec((HIDDEN_DIM, ACTION_DIM), lambda i: (0, 0)),
            pl.BlockSpec((1, ACTION_DIM), lambda i: (0, 0)),
        ],
        out_specs=pl.BlockSpec((tb, ACTION_DIM), lambda i: (i, 0)),
        compiler_params=pltpu.CompilerParams(
            # Batch blocks are independent -> may shard across v7x TensorCores.
            dimension_semantics=("parallel",),
            # Explicit scoped-VMEM budget (v7x physical VMEM is only 64 MiB).
            vmem_limit_bytes=32 * 1024 * 1024,
        ),
    )(x, w1, b1, w2, b2, w3, b3)

    return out[:B] if Bp != B else out


def init_params(key):
    """Deterministic synthetic f32 parameters (shapes mirror the PyTorch module,
    with weights stored as (in_features, out_features))."""
    k1, k2, k3, k4, k5, k6 = jax.random.split(key, 6)
    s1 = 1.0 / jnp.sqrt(STATE_DIM)
    s2 = 1.0 / jnp.sqrt(HIDDEN_DIM)
    w1 = jax.random.uniform(k1, (STATE_DIM, HIDDEN_DIM), jnp.float32, -s1, s1)
    b1 = jax.random.uniform(k2, (1, HIDDEN_DIM), jnp.float32, -s1, s1)
    w2 = jax.random.uniform(k3, (HIDDEN_DIM, HIDDEN_DIM), jnp.float32, -s2, s2)
    b2 = jax.random.uniform(k4, (1, HIDDEN_DIM), jnp.float32, -s2, s2)
    w3 = jax.random.uniform(k5, (HIDDEN_DIM, ACTION_DIM), jnp.float32, -s2, s2)
    b3 = jax.random.uniform(k6, (1, ACTION_DIM), jnp.float32, -s2, s2)
    return (w1, b1, w2, b2, w3, b3)


def qnet_reference(x, params):
    """Pure-JAX f32 reference == the PyTorch module (full-precision matmuls)."""
    w1, b1, w2, b2, w3, b3 = params
    dot = functools.partial(jnp.dot, precision=jax.lax.Precision.HIGHEST)
    h1 = jnp.maximum(dot(x, w1) + b1, 0.0)
    h2 = jnp.maximum(dot(h1, w2) + b2, 0.0)
    return dot(h2, w3) + b3


if __name__ == "__main__":
    key = jax.random.PRNGKey(0)
    pkey, xkey1, xkey2 = jax.random.split(key, 3)

    params = init_params(pkey)  # module-layout f32 params

    # Small batch (single grid block, no padding needed).
    B1 = 32
    x1 = jax.random.normal(xkey1, (B1, STATE_DIM), dtype=jnp.float32)
    out1 = jax.block_until_ready(qnet_forward(x1, params))

    # Tiny ragged batch (exercises the batch-padding path).
    B2 = 6
    x2 = jax.random.normal(xkey2, (B2, STATE_DIM), dtype=jnp.float32)
    out2 = jax.block_until_ready(qnet_forward(x2, params))

    ref1 = qnet_reference(x1, params)
    ref2 = qnet_reference(x2, params)

    assert out1.shape == (B1, ACTION_DIM), out1.shape
    assert out2.shape == (B2, ACTION_DIM), out2.shape
    # Tolerance covers the possibility that default-precision f32 matmuls use
    # bf16 MXU passes (kernel and/or XLA reference); structural errors would be
    # orders of magnitude larger.
    assert jnp.allclose(out1, ref1, atol=2e-2, rtol=2e-2), "mismatch vs reference (B=32)"
    assert jnp.allclose(out2, ref2, atol=2e-2, rtol=2e-2), "mismatch vs reference (B=6)"

    print("KERNEL_OK")
</pallas_src>

<mosaic_0001>
module attributes {stable_mosaic.version = 11 : i64} {
  func.func @qnet_kernel(%arg0: i32, %arg1: memref<32x4xf32, #tpu.memory_space<vmem>>, %arg2: memref<4x128xf32, #tpu.memory_space<vmem>>, %arg3: memref<1x128xf32, #tpu.memory_space<vmem>>, %arg4: memref<128x128xf32, #tpu.memory_space<vmem>>, %arg5: memref<1x128xf32, #tpu.memory_space<vmem>>, %arg6: memref<128x2xf32, #tpu.memory_space<vmem>>, %arg7: memref<1x2xf32, #tpu.memory_space<vmem>>, %arg8: memref<32x2xf32, #tpu.memory_space<vmem>>) attributes {dimension_semantics = [#tpu.dimension_semantics<parallel>], iteration_bounds = array<i64: 1>, scalar_prefetch = 0 : i64, scratch_operands = 0 : i64, tpu.core_type = #tpu.core_type<tc>, window_params = [{transform_indices = @transform_0, window_bounds = array<i64: 32, 4>}, {pipeline_mode = #tpu.pipeline_mode<synchronous>, transform_indices = @transform_1, window_bounds = array<i64: 4, 128>}, {pipeline_mode = #tpu.pipeline_mode<synchronous>, transform_indices = @transform_2, window_bounds = array<i64: 1, 128>}, {pipeline_mode = #tpu.pipeline_mode<synchronous>, transform_indices = @transform_3, window_bounds = array<i64: 128, 128>}, {pipeline_mode = #tpu.pipeline_mode<synchronous>, transform_indices = @transform_4, window_bounds = array<i64: 1, 128>}, {pipeline_mode = #tpu.pipeline_mode<synchronous>, transform_indices = @transform_5, window_bounds = array<i64: 128, 2>}, {pipeline_mode = #tpu.pipeline_mode<synchronous>, transform_indices = @transform_6, window_bounds = array<i64: 1, 2>}, {transform_indices = @transform_7, window_bounds = array<i64: 32, 2>}]} {
    %c0 = arith.constant 0 : index
    %c0_0 = arith.constant 0 : index
    %0 = vector.load %arg1[%c0, %c0_0] : memref<32x4xf32, #tpu.memory_space<vmem>>, vector<32x4xf32>
    %c0_1 = arith.constant 0 : index
    %c0_2 = arith.constant 0 : index
    %1 = vector.load %arg2[%c0_1, %c0_2] : memref<4x128xf32, #tpu.memory_space<vmem>>, vector<4x128xf32>
    %c0_3 = arith.constant 0 : index
    %c0_4 = arith.constant 0 : index
    %2 = vector.load %arg3[%c0_3, %c0_4] : memref<1x128xf32, #tpu.memory_space<vmem>>, vector<1x128xf32>
    %3 = vector.shape_cast %2 : vector<1x128xf32> to vector<1x128xf32>
    %4 = vector.broadcast %3 : vector<1x128xf32> to vector<32x128xf32>
    %5 = vector.extract_strided_slice %0 {offsets = [0, 0], sizes = [32, 1], strides = [1, 1]} : vector<32x4xf32> to vector<32x1xf32>
    %6 = vector.extract_strided_slice %1 {offsets = [0, 0], sizes = [1, 128], strides = [1, 1]} : vector<4x128xf32> to vector<1x128xf32>
    %7 = vector.broadcast %5 : vector<32x1xf32> to vector<32x128xf32>
    %8 = vector.broadcast %6 : vector<1x128xf32> to vector<32x128xf32>
    %9 = arith.mulf %7, %8 : vector<32x128xf32>
    %10 = arith.addf %4, %9 : vector<32x128xf32>
    %11 = vector.extract_strided_slice %0 {offsets = [0, 1], sizes = [32, 1], strides = [1, 1]} : vector<32x4xf32> to vector<32x1xf32>
    %12 = vector.extract_strided_slice %1 {offsets = [1, 0], sizes = [1, 128], strides = [1, 1]} : vector<4x128xf32> to vector<1x128xf32>
    %13 = vector.broadcast %11 : vector<32x1xf32> to vector<32x128xf32>
    %14 = vector.broadcast %12 : vector<1x128xf32> to vector<32x128xf32>
    %15 = arith.mulf %13, %14 : vector<32x128xf32>
    %16 = arith.addf %10, %15 : vector<32x128xf32>
    %17 = vector.extract_strided_slice %0 {offsets = [0, 2], sizes = [32, 1], strides = [1, 1]} : vector<32x4xf32> to vector<32x1xf32>
    %18 = vector.extract_strided_slice %1 {offsets = [2, 0], sizes = [1, 128], strides = [1, 1]} : vector<4x128xf32> to vector<1x128xf32>
    %19 = vector.broadcast %17 : vector<32x1xf32> to vector<32x128xf32>
    %20 = vector.broadcast %18 : vector<1x128xf32> to vector<32x128xf32>
    %21 = arith.mulf %19, %20 : vector<32x128xf32>
    %22 = arith.addf %16, %21 : vector<32x128xf32>
    %23 = vector.extract_strided_slice %0 {offsets = [0, 3], sizes = [32, 1], strides = [1, 1]} : vector<32x4xf32> to vector<32x1xf32>
    %24 = vector.extract_strided_slice %1 {offsets = [3, 0], sizes = [1, 128], strides = [1, 1]} : vector<4x128xf32> to vector<1x128xf32>
    %25 = vector.broadcast %23 : vector<32x1xf32> to vector<32x128xf32>
    %26 = vector.broadcast %24 : vector<1x128xf32> to vector<32x128xf32>
    %27 = arith.mulf %25, %26 : vector<32x128xf32>
    %28 = arith.addf %22, %27 : vector<32x128xf32>
    %cst = arith.constant 0.000000e+00 : f32
    %29 = vector.broadcast %cst : f32 to vector<32x128xf32>
    %30 = arith.maximumf %28, %29 : vector<32x128xf32>
    %c0_5 = arith.constant 0 : index
    %c0_6 = arith.constant 0 : index
    %31 = vector.load %arg4[%c0_5, %c0_6] : memref<128x128xf32, #tpu.memory_space<vmem>>, vector<128x128xf32>
    %cst_7 = arith.constant dense<0.000000e+00> : vector<32x128xf32>
    %32 = tpu.matmul %30, %31, %cst_7 {dimension_numbers = #tpu.dot_dimension_numbers<[1], [0], [0], [1], [0, 0, 1, 1], [], []>} : vector<32x128xf32>, vector<128x128xf32>, vector<32x128xf32> -> vector<32x128xf32>
    %c0_8 = arith.constant 0 : index
    %c0_9 = arith.constant 0 : index
    %33 = vector.load %arg5[%c0_8, %c0_9] : memref<1x128xf32, #tpu.memory_space<vmem>>, vector<1x128xf32>
    %34 = vector.broadcast %33 : vector<1x128xf32> to vector<32x128xf32>
    %35 = arith.addf %32, %34 : vector<32x128xf32>
    %cst_10 = arith.constant 0.000000e+00 : f32
    %36 = vector.broadcast %cst_10 : f32 to vector<32x128xf32>
    %37 = arith.maximumf %35, %36 : vector<32x128xf32>
    %c0_11 = arith.constant 0 : index
    %c0_12 = arith.constant 0 : index
    %38 = vector.load %arg6[%c0_11, %c0_12] : memref<128x2xf32, #tpu.memory_space<vmem>>, vector<128x2xf32>
    %cst_13 = arith.constant dense<0.000000e+00> : vector<32x2xf32>
    %39 = tpu.matmul %37, %38, %cst_13 {dimension_numbers = #tpu.dot_dimension_numbers<[1], [0], [0], [1], [0, 0, 1, 1], [], []>} : vector<32x128xf32>, vector<128x2xf32>, vector<32x2xf32> -> vector<32x2xf32>
    %c0_14 = arith.constant 0 : index
    %c0_15 = arith.constant 0 : index
    %40 = vector.load %arg7[%c0_14, %c0_15] : memref<1x2xf32, #tpu.memory_space<vmem>>, vector<1x2xf32>
    %41 = vector.broadcast %40 : vector<1x2xf32> to vector<32x2xf32>
    %42 = arith.addf %39, %41 : vector<32x2xf32>
    %c0_16 = arith.constant 0 : index
    %c0_17 = arith.constant 0 : index
    %43 = vector.load %arg8[%c0_16, %c0_17] : memref<32x2xf32, #tpu.memory_space<vmem>>, vector<32x2xf32>
    tpu.vector_store %arg8[%c0_16, %c0_17], %42 {strides = array<i32>} : memref<32x2xf32, #tpu.memory_space<vmem>>, vector<32x2xf32>,
    return
  }
  func.func @transform_0(%arg0: i32) -> (i32, i32) {
    %c0_i32 = arith.constant 0 : i32
    %c0_i32_0 = arith.constant 0 : i32
    return %arg0, %c0_i32 : i32, i32
  }
  func.func @transform_1(%arg0: i32) -> (i32, i32) {
    %c0_i32 = arith.constant 0 : i32
    %c0_i32_0 = arith.constant 0 : i32
    %c0_i32_1 = arith.constant 0 : i32
    return %c0_i32, %c0_i32_0 : i32, i32
  }
  func.func @transform_2(%arg0: i32) -> (i32, i32) {
    %c0_i32 = arith.constant 0 : i32
    %c0_i32_0 = arith.constant 0 : i32
    %c0_i32_1 = arith.constant 0 : i32
    return %c0_i32, %c0_i32_0 : i32, i32
  }
  func.func @transform_3(%arg0: i32) -> (i32, i32) {
    %c0_i32 = arith.constant 0 : i32
    %c0_i32_0 = arith.constant 0 : i32
    %c0_i32_1 = arith.constant 0 : i32
    return %c0_i32, %c0_i32_0 : i32, i32
  }
  func.func @transform_4(%arg0: i32) -> (i32, i32) {
    %c0_i32 = arith.constant 0 : i32
    %c0_i32_0 = arith.constant 0 : i32
    %c0_i32_1 = arith.constant 0 : i32
    return %c0_i32, %c0_i32_0 : i32, i32
  }
  func.func @transform_5(%arg0: i32) -> (i32, i32) {
    %c0_i32 = arith.constant 0 : i32
    %c0_i32_0 = arith.constant 0 : i32
    %c0_i32_1 = arith.constant 0 : i32
    return %c0_i32, %c0_i32_0 : i32, i32
  }
  func.func @transform_6(%arg0: i32) -> (i32, i32) {
    %c0_i32 = arith.constant 0 : i32
    %c0_i32_0 = arith.constant 0 : i32
    %c0_i32_1 = arith.constant 0 : i32
    return %c0_i32, %c0_i32_0 : i32, i32
  }
  func.func @transform_7(%arg0: i32) -> (i32, i32) {
    %c0_i32 = arith.constant 0 : i32
    %c0_i32_0 = arith.constant 0 : i32
    return %arg0, %c0_i32 : i32, i32
  }
}

</mosaic_0001>

<llo_original>
// kernel: qnet_forward.1
$region0: #{qnet_forward.1}
  #allocation0 [shape = 'u32[]', space=smem, size = 0x4, offset = 0x4, fixed_abs, tag = 'smem constant byte address 0x4 - core index']
  #allocation1 [shape = 'u32[144,128]{1,0:T(1,128)}', space=vmem, size = 0x12000, scoped, tag = 'internal scratch']
  %s0 = inlined_call_operand.vmem [shape: f32[32,4], index: 0, kind: input, shape index: {}]
  %s1 = inlined_call_operand.vmem [shape: f32[4,128], index: 1, kind: input, shape index: {}]
  %s2 = inlined_call_operand.vmem [shape: f32[1,128], index: 2, kind: input, shape index: {}]
  %s3 = inlined_call_operand.vmem [shape: f32[128,128], index: 3, kind: input, shape index: {}]
  %s4 = inlined_call_operand.vmem [shape: f32[1,128], index: 4, kind: input, shape index: {}]
  %s5 = inlined_call_operand.vmem [shape: f32[128,2], index: 5, kind: input, shape index: {}]
  %s6 = inlined_call_operand.vmem [shape: f32[1,2], index: 6, kind: input, shape index: {}]
  %s7 = inlined_call_operand.vmem [shape: f32[32,2], index: 7, kind: output, shape index: {}]
  %s8 = sld [smem:[#allocation0]]
  $region38: #{qnet_forward.1} parent=0
    _
  %s10 = ssub.s32 1, %s8
  %s11 = scalar_select 0, %s10, %s8
  // Predicated region
  $region2: #{qnet_forward.1} parent=0 // pred_check
    _
  $region3: #{qnet_forward.1} parent=0 // pred_check_branch
    %13 = sbr.rel (0) target = $region5
  $region4: #{qnet_forward.1} parent=0 // pred_region
    _
  $region5: #{qnet_forward.1} parent=0 // pred_fallthru
    _
  // Predicated region
  $region6: #{qnet_forward.1} parent=0 // pred_check
    _
  $region7: #{qnet_forward.1} parent=0 // pred_check_branch
    %15 = sbr.rel (0) target = $region9
  $region8: #{qnet_forward.1} parent=0 // pred_region
    _
  $region9: #{qnet_forward.1} parent=0 // pred_fallthru
    _
  // Predicated region
  $region10: #{qnet_forward.1} parent=0 // pred_check
    _
  $region11: #{qnet_forward.1} parent=0 // pred_check_branch
    %17 = sbr.rel (0) target = $region13
  $region12: #{qnet_forward.1} parent=0 // pred_region
    _
  $region13: #{qnet_forward.1} parent=0 // pred_fallthru
    _
  // Predicated region
  $region14: #{qnet_forward.1} parent=0 // pred_check
    _
  $region15: #{qnet_forward.1} parent=0 // pred_check_branch
    %19 = sbr.rel (0) target = $region17
  $region16: #{qnet_forward.1} parent=0 // pred_region
    _
  $region17: #{qnet_forward.1} parent=0 // pred_fallthru
    _
  // Predicated region
  $region18: #{qnet_forward.1} parent=0 // pred_check
    _
  $region19: #{qnet_forward.1} parent=0 // pred_check_branch
    %21 = sbr.rel (0) target = $region21
  $region20: #{qnet_forward.1} parent=0 // pred_region
    _
  $region21: #{qnet_forward.1} parent=0 // pred_fallthru
    _
  // Predicated region
  $region22: #{qnet_forward.1} parent=0 // pred_check
    _
  $region23: #{qnet_forward.1} parent=0 // pred_check_branch
    %23 = sbr.rel (0) target = $region25
  $region24: #{qnet_forward.1} parent=0 // pred_region
    _
  $region25: #{qnet_forward.1} parent=0 // pred_fallthru
    _
  // Predicated region
  $region26: #{qnet_forward.1} parent=0 // pred_check
    _
  $region27: #{qnet_forward.1} parent=0 // pred_check_branch
    %25 = sbr.rel (0) target = $region29
  $region28: #{qnet_forward.1} parent=0 // pred_region
    _
  $region29: #{qnet_forward.1} parent=0 // pred_fallthru
    _
  %v26 = vld [vmem:[%s0] sm:$0xff]
  %v27 = vld [vmem:[%s0 + $0x8] sm:$0xff]
  %v28 = vld [vmem:[%s0 + $0x10] sm:$0xff]
  %v29 = vld [vmem:[%s0 + $0x18] sm:$0xff]
  %v30 = vld [vmem:[%s1] sm:$0xf]
  %v31 = vld [vmem:[%s2] sm:$0x1]
  %v33 = vlaneseq
  %v34 = vshrl.u32 %v33, 7
  %v35 = vsub.s32 0, %v34
  %v36 = vrot.slane %v31, %v35
  %39 = vset.pattern.permute.xlu0 0
  %40 = vperm.xlu0 %39, %v26
  %v41 = vpop.permute.xlu0 %40
  %44 = vset.pattern.permute.xlu0 0
  %45 = vperm.xlu0 %44, %v27
  %v46 = vpop.permute.xlu0 %45
  %49 = vset.pattern.permute.xlu0 0
  %50 = vperm.xlu0 %49, %v28
  %v51 = vpop.permute.xlu0 %50
  %54 = vset.pattern.permute.xlu0 0
  %55 = vperm.xlu0 %54, %v29
  %v56 = vpop.permute.xlu0 %55
  %v58 = vlaneseq
  %v59 = vshrl.u32 %v58, 7
  %v60 = vsub.s32 0, %v59
  %v61 = vrot.slane %v30, %v60
  %v62 = vmul.f32 %v41, %v61
  %v63 = vmul.f32 %v46, %v61
  %v64 = vmul.f32 %v51, %v61
  %v65 = vmul.f32 %v56, %v61
  %v66 = vadd.f32 %v36, %v62
  %v67 = vadd.f32 %v36, %v63
  %v68 = vadd.f32 %v36, %v64
  %v69 = vadd.f32 %v36, %v65
  %70 = vset.pattern.permute.xlu0 1
  %71 = vperm.xlu0 %70, %v26
  %v72 = vpop.permute.xlu0 %71
  %74 = vset.pattern.permute.xlu0 1
  %75 = vperm.xlu0 %74, %v27
  %v76 = vpop.permute.xlu0 %75
  %78 = vset.pattern.permute.xlu0 1
  %79 = vperm.xlu0 %78, %v28
  %v80 = vpop.permute.xlu0 %79
  %82 = vset.pattern.permute.xlu0 1
  %83 = vperm.xlu0 %82, %v29
  %v84 = vpop.permute.xlu0 %83
  %v86 = vlaneseq
  %v87 = vshrl.u32 %v86, 7
  %v88 = vsub.s32 1, %v87
  %v89 = vrot.slane %v30, %v88
  %v90 = vmul.f32 %v72, %v89
  %v91 = vmul.f32 %v76, %v89
  %v92 = vmul.f32 %v80, %v89
  %v93 = vmul.f32 %v84, %v89
  %v94 = vadd.f32 %v66, %v90
  %v95 = vadd.f32 %v67, %v91
  %v96 = vadd.f32 %v68, %v92
  %v97 = vadd.f32 %v69, %v93
  %98 = vset.pattern.permute.xlu0 2
  %99 = vperm.xlu0 %98, %v26
  %v100 = vpop.permute.xlu0 %99
  %102 = vset.pattern.permute.xlu0 2
  %103 = vperm.xlu0 %102, %v27
  %v104 = vpop.permute.xlu0 %103
  %106 = vset.pattern.permute.xlu0 2
  %107 = vperm.xlu0 %106, %v28
  %v108 = vpop.permute.xlu0 %107
  %110 = vset.pattern.permute.xlu0 2
  %111 = vperm.xlu0 %110, %v29
  %v112 = vpop.permute.xlu0 %111
  %v114 = vlaneseq
  %v115 = vshrl.u32 %v114, 7
  %v116 = vsub.s32 2, %v115
  %v117 = vrot.slane %v30, %v116
  %v118 = vmul.f32 %v100, %v117
  %v119 = vmul.f32 %v104, %v117
  %v120 = vmul.f32 %v108, %v117
  %v121 = vmul.f32 %v112, %v117
  %v122 = vadd.f32 %v94, %v118
  %v123 = vadd.f32 %v95, %v119
  %v124 = vadd.f32 %v96, %v120
  %v125 = vadd.f32 %v97, %v121
  %126 = vset.pattern.permute.xlu0 3
  %127 = vperm.xlu0 %126, %v26
  %v128 = vpop.permute.xlu0 %127
  %130 = vset.pattern.permute.xlu0 3
  %131 = vperm.xlu0 %130, %v27
  %v132 = vpop.permute.xlu0 %131
  %134 = vset.pattern.permute.xlu0 3
  %135 = vperm.xlu0 %134, %v28
  %v136 = vpop.permute.xlu0 %135
  %138 = vset.pattern.permute.xlu0 3
  %139 = vperm.xlu0 %138, %v29
  %v140 = vpop.permute.xlu0 %139
  %v142 = vlaneseq
  %v143 = vshrl.u32 %v142, 7
  %v144 = vsub.s32 3, %v143
  %v145 = vrot.slane %v30, %v144
  %v146 = vmul.f32 %v128, %v145
  %v147 = vmul.f32 %v132, %v145
  %v148 = vmul.f32 %v136, %v145
  %v149 = vmul.f32 %v140, %v145
  %v150 = vadd.f32 %v122, %v146
  %v151 = vadd.f32 %v123, %v147
  %v152 = vadd.f32 %v124, %v148
  %v153 = vadd.f32 %v125, %v149
  %v154 = vmax.f32 %v150, 0.0
  %v155 = vmax.f32 %v151, 0.0
  %v156 = vmax.f32 %v152, 0.0
  %v157 = vmax.f32 %v153, 0.0
  %v158 = vld [vmem:[%s3] sm:$0xff]
  %v159 = vld [vmem:[%s3 + $0x8] sm:$0xff]
  %v160 = vld [vmem:[%s3 + $0x10] sm:$0xff]
  %v161 = vld [vmem:[%s3 + $0x18] sm:$0xff]
  %v162 = vld [vmem:[%s3 + $0x20] sm:$0xff]
  %v163 = vld [vmem:[%s3 + $0x28] sm:$0xff]
  %v164 = vld [vmem:[%s3 + $0x30] sm:$0xff]
  %v165 = vld [vmem:[%s3 + $0x38] sm:$0xff]
  %v166 = vld [vmem:[%s3 + $0x40] sm:$0xff]
  %v167 = vld [vmem:[%s3 + $0x48] sm:$0xff]
  %v168 = vld [vmem:[%s3 + $0x50] sm:$0xff]
  %v169 = vld [vmem:[%s3 + $0x58] sm:$0xff]
  %v170 = vld [vmem:[%s3 + $0x60] sm:$0xff]
  %v171 = vld [vmem:[%s3 + $0x68] sm:$0xff]
  %v172 = vld [vmem:[%s3 + $0x70] sm:$0xff]
  %v173 = vld [vmem:[%s3 + $0x78] sm:$0xff]
  %v174 = vld [vmem:[%s4] sm:$0x1]
  %v176 = vlaneseq
  %v177 = vshrl.u32 %v176, 7
  %v178 = vsub.s32 0, %v177
  %v179 = vrot.slane %v174, %v178
  %181 = vmatprep.subr.mxu0 0.0
  %182 = vmatpush1.msra.mxu0 %v173
  %183 = vmatprep.subr.mxu0 0.0
  %184 = vmatpush1.msra.mxu0 %v172
  %185 = vmatprep.subr.mxu0 0.0
  %186 = vmatpush1.msra.mxu0 %v171
  %187 = vmatprep.subr.mxu0 0.0
  %188 = vmatpush1.msra.mxu0 %v170
  %189 = vmatprep.subr.mxu0 0.0
  %190 = vmatpush1.msra.mxu0 %v169
  %191 = vmatprep.subr.mxu0 0.0
  %192 = vmatpush1.msra.mxu0 %v168
  %193 = vmatprep.subr.mxu0 0.0
  %194 = vmatpush1.msra.mxu0 %v167
  %195 = vmatprep.subr.mxu0 0.0
  %196 = vmatpush1.msra.mxu0 %v166
  %197 = vmatprep.subr.mxu0 0.0
  %198 = vmatpush1.msra.mxu0 %v165
  %199 = vmatprep.subr.mxu0 0.0
  %200 = vmatpush1.msra.mxu0 %v164
  %201 = vmatprep.subr.mxu0 0.0
  %202 = vmatpush1.msra.mxu0 %v163
  %203 = vmatprep.subr.mxu0 0.0
  %204 = vmatpush1.msra.mxu0 %v162
  %205 = vmatprep.subr.mxu0 0.0
  %206 = vmatpush1.msra.mxu0 %v161
  %207 = vmatprep.subr.mxu0 0.0
  %208 = vmatpush1.msra.mxu0 %v160
  %209 = vmatprep.subr.mxu0 0.0
  %210 = vmatpush1.msra.mxu0 %v159
  %211 = vmatprep.subr.mxu0 0.0
  %212 = vmatpush1.msra.mxu0 %v158
  %213 = vmatprep.subr.mxu0 0.0
  %214 = vmatpush2.msra.mxu0 0.0
  %215 = vmatprep.subr.mxu0 0.0
  %216 = vmatpush2.msra.mxu0 0.0
  %217 = vmatprep.subr.mxu0 0.0
  %218 = vmatpush2.msra.mxu0 0.0
  %219 = vmatprep.subr.mxu0 0.0
  %220 = vmatpush2.msra.mxu0 0.0
  %221 = vmatprep.subr.mxu0 0.0
  %222 = vmatpush2.msra.mxu0 0.0
  %223 = vmatprep.subr.mxu0 0.0
  %224 = vmatpush2.msra.mxu0 0.0
  %225 = vmatprep.subr.mxu0 0.0
  %226 = vmatpush2.msra.mxu0 0.0
  %227 = vmatprep.subr.mxu0 0.0
  %228 = vmatpush2.msra.mxu0 0.0
  %229 = vmatprep.subr.mxu0 0.0
  %230 = vmatpush2.msra.mxu0 0.0
  %231 = vmatprep.subr.mxu0 0.0
  %232 = vmatpush2.msra.mxu0 0.0
  %233 = vmatprep.subr.mxu0 0.0
  %234 = vmatpush2.msra.mxu0 0.0
  %235 = vmatprep.subr.mxu0 0.0
  %236 = vmatpush2.msra.mxu0 0.0
  %237 = vmatprep.subr.mxu0 0.0
  %238 = vmatpush2.msra.mxu0 0.0
  %239 = vmatprep.subr.mxu0 0.0
  %240 = vmatpush2.msra.mxu0 0.0
  %241 = vmatprep.subr.mxu0 0.0
  %242 = vmatpush2.msra.mxu0 0.0
  %243 = vmatprep.subr.mxu0 0.0
  %244 = vmatpush2.msra.mxu0 0.0
  %245 = vmatprep.mubr.f32.mxu0 0.0
  %246 = vmatmul.mubr.f32.gmra.mxu0 %v154
  %v247 = vpop.f32.mrf.mxu0
  %v248 = vadd.f32 %v179, %v247
  %v249 = vpop.f32.mrf.mxu0
  %250 = vmatprep.mubr.f32.mxu0 0.0
  %251 = vmatmul.mubr.f32.gmra.mxu0 %v155
  %v252 = vpop.f32.mrf.mxu0
  %v253 = vadd.f32 %v179, %v252
  %v254 = vpop.f32.mrf.mxu0
  %255 = vmatprep.mubr.f32.mxu0 0.0
  %256 = vmatmul.mubr.f32.gmra.mxu0 %v156
  %v257 = vpop.f32.mrf.mxu0
  %v258 = vadd.f32 %v179, %v257
  %v259 = vpop.f32.mrf.mxu0
  %260 = vmatprep.mubr.f32.mxu0 0.0
  %261 = vmatmul.mubr.f32.gmra.mxu0 %v157
  %v262 = vpop.f32.mrf.mxu0
  %v263 = vadd.f32 %v179, %v262
  %v264 = vpop.f32.mrf.mxu0
  %265 = vdwg.mxu0
  %v266 = vmax.f32 %v248, 0.0
  %v267 = vmax.f32 %v253, 0.0
  %v268 = vmax.f32 %v258, 0.0
  %v269 = vmax.f32 %v263, 0.0
  %v270 = vld [vmem:[%s5] sm:$0xff]
  %v271 = vld [vmem:[%s5 + $0x8] sm:$0xff]
  %v272 = vld [vmem:[%s5 + $0x10] sm:$0xff]
  %v273 = vld [vmem:[%s5 + $0x18] sm:$0xff]
  %v274 = vld [vmem:[%s5 + $0x20] sm:$0xff]
  %v275 = vld [vmem:[%s5 + $0x28] sm:$0xff]
  %v276 = vld [vmem:[%s5 + $0x30] sm:$0xff]
  %v277 = vld [vmem:[%s5 + $0x38] sm:$0xff]
  %v278 = vld [vmem:[%s5 + $0x40] sm:$0xff]
  %v279 = vld [vmem:[%s5 + $0x48] sm:$0xff]
  %v280 = vld [vmem:[%s5 + $0x50] sm:$0xff]
  %v281 = vld [vmem:[%s5 + $0x58] sm:$0xff]
  %v282 = vld [vmem:[%s5 + $0x60] sm:$0xff]
  %v283 = vld [vmem:[%s5 + $0x68] sm:$0xff]
  %v284 = vld [vmem:[%s5 + $0x70] sm:$0xff]
  %v285 = vld [vmem:[%s5 + $0x78] sm:$0xff]
  %v286 = vld [vmem:[%s6] sm:$0x1]
  %v288 = vlaneseq
  %v289 = vshrl.u32 %v288, 7
  %v290 = vsub.s32 0, %v289
  %v291 = vrot.slane %v286, %v290
  %293 = vmatprep.subr.mxu0 0.0
  %294 = vmatpush1.msra.mxu0 %v285
  %295 = vmatprep.subr.mxu0 0.0
  %296 = vmatpush1.msra.mxu0 %v284
  %297 = vmatprep.subr.mxu0 0.0
  %298 = vmatpush1.msra.mxu0 %v283
  %299 = vmatprep.subr.mxu0 0.0
  %300 = vmatpush1.msra.mxu0 %v282
  %301 = vmatprep.subr.mxu0 0.0
  %302 = vmatpush1.msra.mxu0 %v281
  %303 = vmatprep.subr.mxu0 0.0
  %304 = vmatpush1.msra.mxu0 %v280
  %305 = vmatprep.subr.mxu0 0.0
  %306 = vmatpush1.msra.mxu0 %v279
  %307 = vmatprep.subr.mxu0 0.0
  %308 = vmatpush1.msra.mxu0 %v278
  %309 = vmatprep.subr.mxu0 0.0
  %310 = vmatpush1.msra.mxu0 %v277
  %311 = vmatprep.subr.mxu0 0.0
  %312 = vmatpush1.msra.mxu0 %v276
  %313 = vmatprep.subr.mxu0 0.0
  %314 = vmatpush1.msra.mxu0 %v275
  %315 = vmatprep.subr.mxu0 0.0
  %316 = vmatpush1.msra.mxu0 %v274
  %317 = vmatprep.subr.mxu0 0.0
  %318 = vmatpush1.msra.mxu0 %v273
  %319 = vmatprep.subr.mxu0 0.0
  %320 = vmatpush1.msra.mxu0 %v272
  %321 = vmatprep.subr.mxu0 0.0
  %322 = vmatpush1.msra.mxu0 %v271
  %323 = vmatprep.subr.mxu0 0.0
  %324 = vmatpush1.msra.mxu0 %v270
  %325 = vmatprep.subr.mxu0 0.0
  %326 = vmatpush2.msra.mxu0 0.0
  %327 = vmatprep.subr.mxu0 0.0
  %328 = vmatpush2.msra.mxu0 0.0
  %329 = vmatprep.subr.mxu0 0.0
  %330 = vmatpush2.msra.mxu0 0.0
  %331 = vmatprep.subr.mxu0 0.0
  %332 = vmatpush2.msra.mxu0 0.0
  %333 = vmatprep.subr.mxu0 0.0
  %334 = vmatpush2.msra.mxu0 0.0
  %335 = vmatprep.subr.mxu0 0.0
  %336 = vmatpush2.msra.mxu0 0.0
  %337 = vmatprep.subr.mxu0 0.0
  %338 = vmatpush2.msra.mxu0 0.0
  %339 = vmatprep.subr.mxu0 0.0
  %340 = vmatpush2.msra.mxu0 0.0
  %341 = vmatprep.subr.mxu0 0.0
  %342 = vmatpush2.msra.mxu0 0.0
  %343 = vmatprep.subr.mxu0 0.0
  %344 = vmatpush2.msra.mxu0 0.0
  %345 = vmatprep.subr.mxu0 0.0
  %346 = vmatpush2.msra.mxu0 0.0
  %347 = vmatprep.subr.mxu0 0.0
  %348 = vmatpush2.msra.mxu0 0.0
  %349 = vmatprep.subr.mxu0 0.0
  %350 = vmatpush2.msra.mxu0 0.0
  %351 = vmatprep.subr.mxu0 0.0
  %352 = vmatpush2.msra.mxu0 0.0
  %353 = vmatprep.subr.mxu0 0.0
  %354 = vmatpush2.msra.mxu0 0.0
  %355 = vmatprep.subr.mxu0 0.0
  %356 = vmatpush2.msra.mxu0 0.0
  %357 = vmatprep.mubr.f32.mxu0 0.0
  %358 = vmatmul.mubr.f32.gmra.mxu0 %v266
  %v359 = vpop.f32.mrf.mxu0
  %v360 = vadd.f32 %v291, %v359
  %v361 = vpop.f32.mrf.mxu0
  %362 = vmatprep.mubr.f32.mxu0 0.0
  %363 = vmatmul.mubr.f32.gmra.mxu0 %v267
  %v364 = vpop.f32.mrf.mxu0
  %v365 = vadd.f32 %v291, %v364
  %v366 = vpop.f32.mrf.mxu0
  %367 = vmatprep.mubr.f32.mxu0 0.0
  %368 = vmatmul.mubr.f32.gmra.mxu0 %v268
  %v369 = vpop.f32.mrf.mxu0
  %v370 = vadd.f32 %v291, %v369
  %v371 = vpop.f32.mrf.mxu0
  %372 = vmatprep.mubr.f32.mxu0 0.0
  %373 = vmatmul.mubr.f32.gmra.mxu0 %v269
  %v374 = vpop.f32.mrf.mxu0
  %v375 = vadd.f32 %v291, %v374
  %v376 = vpop.f32.mrf.mxu0
  %377 = vdwg.mxu0
  %vm378 = vcmask 15360
  %379 = vst.msk [vmem:[%s7] sm:$0xff] %vm378, %v360
  %380 = vst.msk [vmem:[%s7 + $0x8] sm:$0xff] %vm378, %v365
  %381 = vst.msk [vmem:[%s7 + $0x10] sm:$0xff] %vm378, %v370
  %382 = vst.msk [vmem:[%s7 + $0x18] sm:$0xff] %vm378, %v375
  // Predicated region
  $region30: #{qnet_forward.1} parent=0 // pred_check
    _
  $region31: #{qnet_forward.1} parent=0 // pred_check_branch
    %384 = sbr.rel (0) target = $region33
  $region32: #{qnet_forward.1} parent=0 // pred_region
    _
  $region33: #{qnet_forward.1} parent=0 // pred_fallthru
    _
  // Predicated region
  $region34: #{qnet_forward.1} parent=0 // pred_check
    _
  $region35: #{qnet_forward.1} parent=0 // pred_check_branch
    %386 = sbr.rel (0) target = $region37
  $region36: #{qnet_forward.1} parent=0 // pred_region
    _
  $region37: #{qnet_forward.1} parent=0 // pred_fallthru
    _

</llo_original>
